<compile_context>
chip_gen: v5e
topology: v5e:2x2
jax: 0.10.0
libtpu: 0.0.40
codegen_flags: <defaults>
</compile_context>

<pallas_src>
import functools

import numpy as np
import jax
import jax.numpy as jnp
from jax import lax
from jax.experimental import pallas as pl
from jax.experimental.pallas import tpu as pltpu

ALPHA = 1.0   # module default
GAMMA = 2     # module default; lowered to an explicit multiply in the kernel
LANES = 128
SUBLANES = 8


def _round_up(x, m):
    return (x + m - 1) // m * m


def _tc_split():
    """Return (num TensorCores worth splitting over, use CORE_PARALLEL)."""
    try:
        kind = jax.devices()[0].device_kind.lower()
    except Exception:
        return 1, False
    if "7" in kind:                                   # v7x: 2 TCs per chip
        return 2, True
    if "lite" in kind or "v5e" in kind or "v6" in kind:
        return 1, False                               # v5e / v6e: single TC
    if "v4" in kind or "v5p" in kind:
        return 2, False                               # megacore: "parallel" shards
    return 1, False


def _focal_loss_kernel(x_ref, t_ref, o_ref, *, total_elems, tile_rows,
                       tiles_per_chunk, first_masked_tile):
    c = pl.program_id(0)   # TensorCore / chunk axis
    j = pl.program_id(1)   # reduction axis ("arbitrary")

    @pl.when(j == 0)
    def _():
        o_ref[...] = jnp.zeros_like(o_ref)

    x = x_ref[...].astype(jnp.float32)
    t = t_ref[...].astype(jnp.float32)

    # Numerically stable BCE-with-logits — one exp + one log1p per element:
    #   e   = exp(-|x|);  bce = relu(x) - x*t + log1p(e)
    e = jnp.exp(-jnp.abs(x))
    bce = jnp.maximum(x, 0.0) - x * t + jnp.log1p(e)

    # sigmoid(x) recovered from the SAME e (no second exp):
    #   x >= 0: 1/(1+e)      x < 0: e/(1+e)
    # (pl.reciprocal(1+e, approx=True) is a further EUP saving on v7x; the
    #  exact divide keeps the result bit-comparable to the f32 reference.)
    p = jnp.where(x >= 0.0, 1.0, e) / (1.0 + e)

    # pt = exp(-bce); for hard 0/1 targets this equals t*p + (1-t)*(1-p).
    # TODO(synk): soft (non-binary) targets would need pt = p**t * (1-p)**(1-t).
    pt = t * p + (1.0 - t) * (1.0 - p)
    omp = 1.0 - pt
    f_loss = ALPHA * (omp * omp) * bce        # (1 - pt) ** GAMMA, GAMMA == 2

    def _accumulate(v):
        # vreg-shaped partial sums: pure (8,128) VPU adds in the hot loop; the
        # single cross-lane/sublane reduction happens once in the wrapper.
        o_ref[0] += v.reshape(tile_rows // SUBLANES, SUBLANES, LANES).sum(axis=0)

    if first_masked_tile is None:
        _accumulate(f_loss)
    else:
        tile_idx = c * tiles_per_chunk + j

        @pl.when(tile_idx < first_masked_tile)
        def _():
            _accumulate(f_loss)

        @pl.when(tile_idx >= first_masked_tile)
        def _():
            # Only the ragged / phantom tail tiles pay for the iota mask.
            base = tile_idx * (tile_rows * LANES)
            rid = lax.broadcasted_iota(jnp.int32, (tile_rows, LANES), 0)
            lid = lax.broadcasted_iota(jnp.int32, (tile_rows, LANES), 1)
            valid = (base + rid * LANES + lid) < total_elems
            _accumulate(jnp.where(valid, f_loss, 0.0))


def focal_loss(inputs, targets, *, tile_rows=4096):
    """Scalar mean focal loss (alpha=1, gamma=2, logits=True, reduce=True)."""
    assert inputs.shape == targets.shape
    total = int(np.prod(inputs.shape))

    x = inputs.reshape(-1)     # free for contiguous arrays; dtype cast in-kernel
    t = targets.reshape(-1)

    pad = (-total) % LANES
    if pad:
        # TODO(synk): the ragged (total % 128 != 0) path still materializes one
        # small pad copy; could be eliminated via allow_input_fusion.
        x = jnp.pad(x, (0, pad))
        t = jnp.pad(t, (0, pad))
    rows = (total + pad) // LANES

    # Large lane-dense tiles (default 4096 rows = 2 MiB f32 per input block) to
    # amortize the per-grid-step overhead; clamp for small inputs.  Multiple of
    # 16 so bf16 inputs also tile cleanly.
    tile_rows = _round_up(max(16, min(int(tile_rows), _round_up(rows, 16))), 16)
    tiles = pl.cdiv(rows, tile_rows)

    n_cores, core_parallel = _tc_split()
    n_chunks = n_cores if tiles >= n_cores else 1
    tiles_per_chunk = pl.cdiv(tiles, n_chunks)
    num_grid_tiles = n_chunks * tiles_per_chunk

    # First logical tile index that can see padded / out-of-range elements.
    k0 = total // (tile_rows * LANES)
    first_masked_tile = k0 if num_grid_tiles > k0 else None

    if num_grid_tiles == tiles:
        in_map = lambda c, j: (c * tiles_per_chunk + j, 0)
    else:
        # Phantom tiles (odd tile count split over 2 cores) are clamped onto
        # the last real block; their contribution is masked to zero in-kernel.
        in_map = lambda c, j: (jnp.minimum(c * tiles_per_chunk + j, tiles - 1), 0)

    chunk_sem = (pltpu.CORE_PARALLEL
                 if (core_parallel and n_chunks > 1) else pltpu.PARALLEL)

    x2d = x.reshape(rows, LANES)
    t2d = t.reshape(rows, LANES)

    kernel = functools.partial(
        _focal_loss_kernel,
        total_elems=total,
        tile_rows=tile_rows,
        tiles_per_chunk=tiles_per_chunk,
        first_masked_tile=first_masked_tile,
    )

    in_bytes = (x2d.dtype.itemsize + t2d.dtype.itemsize) * total
    partials = pl.pallas_call(
        kernel,
        out_shape=jax.ShapeDtypeStruct((n_chunks, SUBLANES, LANES), jnp.float32),
        grid_spec=pltpu.PrefetchScalarGridSpec(
            num_scalar_prefetch=0,
            grid=(n_chunks, tiles_per_chunk),
            in_specs=[
                pl.BlockSpec((tile_rows, LANES), in_map),
                pl.BlockSpec((tile_rows, LANES), in_map),
            ],
            out_specs=pl.BlockSpec((1, SUBLANES, LANES), lambda c, j: (c, 0, 0)),
        ),
        compiler_params=pltpu.CompilerParams(
            dimension_semantics=(chunk_sem, pltpu.ARBITRARY),
            # 2 inputs x 2 pipeline buffers x (tile_rows*128*4 B); also leaves
            # headroom for tile_rows up to ~8192 on v5e's smaller default
            # scoped-VMEM budget.
            vmem_limit_bytes=32 * 1024 * 1024,
        ),
        cost_estimate=pl.CostEstimate(
            flops=20 * total,
            transcendentals=2 * total,
            bytes_accessed=in_bytes + n_chunks * SUBLANES * LANES * 4,
        ),
    )(x2d, t2d)

    # Single cheap cross-lane/sublane reduction + mean, outside the hot loop.
    return jnp.sum(partials) / jnp.float32(total)


def _reference(inputs, targets):
    x = inputs.astype(jnp.float32)
    t = targets.astype(jnp.float32)
    bce = jnp.maximum(x, 0.0) - x * t + jnp.log1p(jnp.exp(-jnp.abs(x)))
    pt = jnp.exp(-bce)
    return jnp.mean(ALPHA * (1.0 - pt) ** GAMMA * bce)


if __name__ == "__main__":
    key = jax.random.PRNGKey(0)
    k1, k2 = jax.random.split(key)

    # NCHW: batch=2, channels=4, spatial=16x16
    shape = (2, 4, 16, 16)
    inputs = jax.random.normal(k1, shape, dtype=jnp.float32)             # logits
    targets = jax.random.bernoulli(k2, 0.3, shape).astype(jnp.float32)   # binary labels

    out = focal_loss(inputs, targets)
    out = jax.block_until_ready(out)

    ref = _reference(inputs, targets)
    assert jnp.allclose(out, ref, atol=1e-5, rtol=1e-5), (out, ref)
    print("KERNEL_OK")
</pallas_src>

<mosaic_0001>
module attributes {stable_mosaic.version = 11 : i64} {
  func.func @_focal_loss_kernel(%arg0: i32, %arg1: i32, %arg2: memref<16x128xf32, #tpu.memory_space<vmem>>, %arg3: memref<16x128xf32, #tpu.memory_space<vmem>>, %arg4: memref<1x8x128xf32, #tpu.memory_space<vmem>>) attributes {dimension_semantics = [#tpu.dimension_semantics<parallel>, #tpu.dimension_semantics<arbitrary>], iteration_bounds = array<i64: 1, 1>, scalar_prefetch = 0 : i64, scratch_operands = 0 : i64, tpu.core_type = #tpu.core_type<tc>, window_params = [{transform_indices = @transform_0, window_bounds = array<i64: 16, 128>}, {transform_indices = @transform_1, window_bounds = array<i64: 16, 128>}, {transform_indices = @transform_2, window_bounds = array<i64: 1, 8, 128>}]} {
    %c0_i32 = arith.constant 0 : i32
    %0 = arith.cmpi eq, %arg1, %c0_i32 : i32
    %1 = arith.extui %0 : i1 to i32
    %c0_i32_0 = arith.constant 0 : i32
    %2 = arith.cmpi ne, %1, %c0_i32_0 : i32
    scf.if %2 {
      %cst_19 = arith.constant 0.000000e+00 : f32
      %43 = vector.broadcast %cst_19 : f32 to vector<1x8x128xf32>
      %c0_20 = arith.constant 0 : index
      %c0_21 = arith.constant 0 : index
      %c0_22 = arith.constant 0 : index
      %44 = vector.load %arg4[%c0_20, %c0_21, %c0_22] : memref<1x8x128xf32, #tpu.memory_space<vmem>>, vector<1x8x128xf32>
      tpu.vector_store %arg4[%c0_20, %c0_21, %c0_22], %43 {strides = array<i32>} : memref<1x8x128xf32, #tpu.memory_space<vmem>>, vector<1x8x128xf32>,
    } else {
    }
    %c0 = arith.constant 0 : index
    %c0_1 = arith.constant 0 : index
    %3 = vector.load %arg2[%c0, %c0_1] : memref<16x128xf32, #tpu.memory_space<vmem>>, vector<16x128xf32>
    %c0_2 = arith.constant 0 : index
    %c0_3 = arith.constant 0 : index
    %4 = vector.load %arg3[%c0_2, %c0_3] : memref<16x128xf32, #tpu.memory_space<vmem>>, vector<16x128xf32>
    %5 = math.absf %3 : vector<16x128xf32>
    %cst = arith.constant 0.000000e+00 : f32
    %6 = vector.broadcast %cst : f32 to vector<16x128xf32>
    %7 = arith.subf %6, %5 : vector<16x128xf32>
    %8 = math.exp %7 : vector<16x128xf32>
    %cst_4 = arith.constant 0.000000e+00 : f32
    %9 = vector.broadcast %cst_4 : f32 to vector<16x128xf32>
    %10 = arith.maximumf %3, %9 : vector<16x128xf32>
    %11 = arith.mulf %3, %4 : vector<16x128xf32>
    %12 = arith.subf %10, %11 : vector<16x128xf32>
    %13 = math.log1p %8 : vector<16x128xf32>
    %14 = arith.addf %12, %13 : vector<16x128xf32>
    %cst_5 = arith.constant 0.000000e+00 : f32
    %15 = vector.broadcast %cst_5 : f32 to vector<16x128xf32>
    %16 = arith.cmpf oge, %3, %15 : vector<16x128xf32>
    %cst_6 = arith.constant 1.000000e+00 : f32
    %17 = vector.broadcast %cst_6 : f32 to vector<16x128xf32>
    %18 = arith.select %16, %17, %8 : vector<16x128xi1>, vector<16x128xf32>
    %cst_7 = arith.constant 1.000000e+00 : f32
    %19 = vector.broadcast %cst_7 : f32 to vector<16x128xf32>
    %20 = arith.addf %19, %8 : vector<16x128xf32>
    %21 = arith.divf %18, %20 : vector<16x128xf32>
    %22 = arith.mulf %4, %21 : vector<16x128xf32>
    %cst_8 = arith.constant 1.000000e+00 : f32
    %23 = vector.broadcast %cst_8 : f32 to vector<16x128xf32>
    %24 = arith.subf %23, %4 : vector<16x128xf32>
    %cst_9 = arith.constant 1.000000e+00 : f32
    %25 = vector.broadcast %cst_9 : f32 to vector<16x128xf32>
    %26 = arith.subf %25, %21 : vector<16x128xf32>
    %27 = arith.mulf %24, %26 : vector<16x128xf32>
    %28 = arith.addf %22, %27 : vector<16x128xf32>
    %cst_10 = arith.constant 1.000000e+00 : f32
    %29 = vector.broadcast %cst_10 : f32 to vector<16x128xf32>
    %30 = arith.subf %29, %28 : vector<16x128xf32>
    %31 = arith.mulf %30, %30 : vector<16x128xf32>
    %cst_11 = arith.constant 1.000000e+00 : f32
    %32 = vector.broadcast %cst_11 : f32 to vector<16x128xf32>
    %33 = arith.mulf %32, %31 : vector<16x128xf32>
    %34 = arith.mulf %33, %14 : vector<16x128xf32>
    %c0_12 = arith.constant 0 : index
    %c0_13 = arith.constant 0 : index
    %c0_14 = arith.constant 0 : index
    %35 = vector.load %arg4[%c0_12, %c0_13, %c0_14] : memref<1x8x128xf32, #tpu.memory_space<vmem>>, vector<1x8x128xf32>
    %36 = vector.shape_cast %35 : vector<1x8x128xf32> to vector<8x128xf32>
    %37 = vector.shape_cast %34 : vector<16x128xf32> to vector<2x8x128xf32>
    %cst_15 = arith.constant dense<0.000000e+00> : vector<8x128xf32>
    %38 = vector.multi_reduction <add>, %37, %cst_15 [0] : vector<2x8x128xf32> to vector<8x128xf32>
    %39 = arith.addf %36, %38 : vector<8x128xf32>
    %c0_16 = arith.constant 0 : index
    %c0_17 = arith.constant 0 : index
    %c0_18 = arith.constant 0 : index
    %40 = vector.load %arg4[%c0_16, %c0_17, %c0_18] : memref<1x8x128xf32, #tpu.memory_space<vmem>>, vector<1x8x128xf32>
    %41 = vector.shape_cast %40 : vector<1x8x128xf32> to vector<8x128xf32>
    %42 = vector.shape_cast %39 : vector<8x128xf32> to vector<1x8x128xf32>
    tpu.vector_store %arg4[%c0_16, %c0_17, %c0_18], %42 {strides = array<i32>} : memref<1x8x128xf32, #tpu.memory_space<vmem>>, vector<1x8x128xf32>,
    return
  }
  func.func @transform_0(%arg0: i32, %arg1: i32) -> (i32, i32) {
    %c1_i32 = arith.constant 1 : i32
    %0 = arith.muli %arg0, %c1_i32 : i32
    %1 = arith.addi %0, %arg1 : i32
    %c0_i32 = arith.constant 0 : i32
    %c0_i32_0 = arith.constant 0 : i32
    return %1, %c0_i32 : i32, i32
  }
  func.func @transform_1(%arg0: i32, %arg1: i32) -> (i32, i32) {
    %c1_i32 = arith.constant 1 : i32
    %0 = arith.muli %arg0, %c1_i32 : i32
    %1 = arith.addi %0, %arg1 : i32
    %c0_i32 = arith.constant 0 : i32
    %c0_i32_0 = arith.constant 0 : i32
    return %1, %c0_i32 : i32, i32
  }
  func.func @transform_2(%arg0: i32, %arg1: i32) -> (i32, i32, i32) {
    %c0_i32 = arith.constant 0 : i32
    %c0_i32_0 = arith.constant 0 : i32
    %c0_i32_1 = arith.constant 0 : i32
    return %arg0, %c0_i32, %c0_i32_0 : i32, i32, i32
  }
}

</mosaic_0001>

<llo_original>
// kernel: tpu_custom_call.1
$region0: #{tpu_custom_call.1}
  #allocation0 [shape = 'u32[]', space=smem, size = 0x4, offset = 0x4, fixed_abs, tag = 'smem constant byte address 0x4 - core index']
  #allocation1 [shape = 'u32[72,128]{1,0:T(1,128)}', space=vmem, size = 0x9000, scoped, tag = 'internal scratch']
  %s0 = inlined_call_operand.hbm [shape: f32[16,128], index: 0, kind: input, shape index: {}]
  %s1 = inlined_call_operand.hbm [shape: f32[16,128], index: 1, kind: input, shape index: {}]
  %s2 = inlined_call_operand.hbm [shape: f32[1,8,128], index: 2, kind: output, shape index: {}]
  %s3 = sld [smem:[#allocation0]]
  $region30: #{tpu_custom_call.1} parent=0
    _
  %s5 = ssub.s32 1, %s3
  %s6 = scalar_select 0, %s5, %s3
  $region1: #{tpu_custom_call.1} parent=0
    #allocation2 [shape = 'u8[8192]{0}', space=vmem, size = 0x2000, scoped, tag = 'input window, operand 0, single buffered']
    #allocation3 [shape = 's32[1]{0}', space=sflag, size = 0x4, scoped, tag = 'scoped memory for tpu_custom_call.1']
    #allocation4 [shape = 's32[1]{0}', space=sflag, size = 0x4, scoped, tag = 'scoped memory for tpu_custom_call.1']
    #allocation5 [shape = 'u8[8192]{0}', space=vmem, size = 0x2000, scoped, tag = 'input window, operand 1, single buffered']
    #allocation6 [shape = 's32[1]{0}', space=sflag, size = 0x4, scoped, tag = 'scoped memory for tpu_custom_call.1']
    #allocation7 [shape = 'u8[4096]{0}', space=vmem, size = 0x1000, scoped, tag = 'output window, operand 0, single buffered']
    %7 = vsyncpa [#allocation3], 0
    %8 = vsyncpa [#allocation6], 0
    %9 = vsyncpa [#allocation4], 0
    // Predicated region
    $region2: #{tpu_custom_call.1} parent=1 // pred_check
      _
    $region3: #{tpu_custom_call.1} parent=1 // pred_check_branch
      %11 = sbr.rel (0) target = $region5
    $region4: #{tpu_custom_call.1} parent=1 // pred_region
      %s12 = sadd.s32 0, 0
      %s13 = smul.u32 2, %s12
      %15 = vsyncadd [#allocation3], 0
      %s16 = smul.addr %s13, 8
      %s17 = scalar_lea.hbm %s0, %s16
      %s18 = sshll.u32 %s17, 4
      %s19 = int_to_ptr.hbm [resolvable:$true] %s18
      %s20 = sshll.u32 [#allocation2], 4
      %s21 = int_to_ptr.vmem [resolvable:$true] %s20
      %26 = dma.hbm_to_vmem [thread:$0]  %s19, 256, %s21, [#allocation3], 128, 128, 8
    $region5: #{tpu_custom_call.1} parent=1 // pred_fallthru
      _
    // Predicated region
    $region6: #{tpu_custom_call.1} parent=1 // pred_check
      _
    $region7: #{tpu_custom_call.1} parent=1 // pred_check_branch
      %28 = sbr.rel (0) target = $region9
    $region8: #{tpu_custom_call.1} parent=1 // pred_region
      %s29 = sadd.s32 0, 0
      %s30 = smul.u32 2, %s29
      %32 = vsyncadd [#allocation6], 0
      %s33 = smul.addr %s30, 8
      %s34 = scalar_lea.hbm %s1, %s33
      %s35 = sshll.u32 %s34, 4
      %s36 = int_to_ptr.hbm [resolvable:$true] %s35
      %s37 = sshll.u32 [#allocation5], 4
      %s38 = int_to_ptr.vmem [resolvable:$true] %s37
      %43 = dma.hbm_to_vmem [thread:$0]  %s36, 256, %s38, [#allocation6], 128, 128, 8
    $region9: #{tpu_custom_call.1} parent=1 // pred_fallthru
      _
    // Predicated region
    $region10: #{tpu_custom_call.1} parent=1 // pred_check
      _
    $region11: #{tpu_custom_call.1} parent=1 // pred_check_branch
      %45 = sbr.rel (0) target = $region13
    $region12: #{tpu_custom_call.1} parent=1 // pred_region
      %47 = dma.done [#allocation3], 256
    $region13: #{tpu_custom_call.1} parent=1 // pred_fallthru
      _
    // Predicated region
    $region14: #{tpu_custom_call.1} parent=1 // pred_check
      _
    $region15: #{tpu_custom_call.1} parent=1 // pred_check_branch
      %49 = sbr.rel (0) target = $region17
    $region16: #{tpu_custom_call.1} parent=1 // pred_region
      %51 = dma.done [#allocation6], 256
    $region17: #{tpu_custom_call.1} parent=1 // pred_fallthru
      _
    %s52 = sadd.s32 0, 0
    %s53 = smul.u32 2, %s52
    %s54 = sadd.s32 0, 0
    %s55 = smul.u32 2, %s54
    %p56 = scmp.eq.s32.totalorder 0, 0
    // Predicated region
    $region18: #{tpu_custom_call.1} parent=1 // pred_check
      %p57 = pneg %p56
    $region19: #{tpu_custom_call.1} parent=1 // pred_check_branch
      %59 = sbr.rel (%p57) target = $region21
    $region20: #{tpu_custom_call.1} parent=1 // pred_region
      %60 = vst [vmem:[#allocation7] sm:$0xff] 0.0
    $region21: #{tpu_custom_call.1} parent=1 // pred_fallthru
      _
    %v61 = vld [vmem:[#allocation2] sm:$0xff]
    %v62 = vld [vmem:[#allocation2 + $0x8] sm:$0xff]
    %v63 = vld [vmem:[#allocation5] sm:$0xff]
    %v64 = vld [vmem:[#allocation5 + $0x8] sm:$0xff]
    %v65 = vand.u32 2147483647, %v61
    %v66 = vand.u32 2147483647, %v62
    %v67 = vsub.f32 0.0, %v65
    %v68 = vsub.f32 0.0, %v66
    %v69 = vmul.f32 %v67, 1.442695
    %v70 = vpow.pop %v69
    %v71 = vmul.f32 %v68, 1.442695
    %v72 = vpow.pop %v71
    %v73 = vmax.f32 %v61, 0.0
    %v74 = vmax.f32 %v62, 0.0
    %v75 = vmul.f32 %v61, %v63
    %v76 = vmul.f32 %v62, %v64
    %v77 = vsub.f32 %v73, %v75
    %v78 = vsub.f32 %v74, %v76
    %v79 = vadd.f32 %v70, 1.0
    %v80 = vlog2.pop %v79
    %v81 = vmul.f32 %v80, 0.6931472
    %v82 = vmul.f32 -0.5, %v70
    %v83 = vadd.f32 %v82, 1.0
    %v84 = vmul.f32 %v83, %v70
    %v85 = vand.u32 2147483647, %v70
    %vm86 = vcmp.lt.f32.partialorder %v85, 0.0004427343
    %v87 = vsel %vm86, %v84, %v81
    %v88 = vadd.f32 %v72, 1.0
    %v89 = vlog2.pop %v88
    %v90 = vmul.f32 %v89, 0.6931472
    %v91 = vmul.f32 -0.5, %v72
    %v92 = vadd.f32 %v91, 1.0
    %v93 = vmul.f32 %v92, %v72
    %v94 = vand.u32 2147483647, %v72
    %vm95 = vcmp.lt.f32.partialorder %v94, 0.0004427343
    %v96 = vsel %vm95, %v93, %v90
    %v97 = vadd.f32 %v77, %v87
    %v98 = vadd.f32 %v78, %v96
    %vm99 = vcmp.ge.f32.partialorder %v61, 0.0
    %vm100 = vcmp.ge.f32.partialorder %v62, 0.0
    %v101 = vsel %vm99, 1.0, %v70
    %v102 = vsel %vm100, 1.0, %v72
    %v103 = vadd.f32 %v70, 1.0
    %v104 = vadd.f32 %v72, 1.0
    %v105 = vrcp.pop %v103
    %v106 = vmul.f32 %v103, %v105
    %v107 = vsub.f32 1.0, %v106
    %v108 = vmul.f32 %v105, %v107
    %v109 = vadd.f32 %v105, %v108
    %vm110 = vweird.f32 %v103
    %vm111 = vweird.f32 %v105
    %vm112 = vmor %vm110, %vm111
    %v113 = vsel %vm112, %v105, %v109
    %v114 = vand.u32 2147483647, %v103
    %vm115 = vcmp.eq.f32.partialorder %v114, 8.507059e+37
    %v116 = vand.u32 %v103, 2147483648
    %v117 = vor.u32 1.1754944e-38, %v116
    %v118 = vsel %vm115, %v117, %v113
    %v119 = vmul.f32 %v101, %v118
    %v120 = vrcp.pop %v104
    %v121 = vmul.f32 %v104, %v120
    %v122 = vsub.f32 1.0, %v121
    %v123 = vmul.f32 %v120, %v122
    %v124 = vadd.f32 %v120, %v123
    %vm125 = vweird.f32 %v104
    %vm126 = vweird.f32 %v120
    %vm127 = vmor %vm125, %vm126
    %v128 = vsel %vm127, %v120, %v124
    %v129 = vand.u32 2147483647, %v104
    %vm130 = vcmp.eq.f32.partialorder %v129, 8.507059e+37
    %v131 = vand.u32 %v104, 2147483648
    %v132 = vor.u32 1.1754944e-38, %v131
    %v133 = vsel %vm130, %v132, %v128
    %v134 = vmul.f32 %v102, %v133
    %v135 = vmul.f32 %v63, %v119
    %v136 = vmul.f32 %v64, %v134
    %v137 = vsub.f32 1.0, %v63
    %v138 = vsub.f32 1.0, %v64
    %v139 = vsub.f32 1.0, %v119
    %v140 = vsub.f32 1.0, %v134
    %v141 = vmul.f32 %v137, %v139
    %v142 = vmul.f32 %v138, %v140
    %v143 = vadd.f32 %v135, %v141
    %v144 = vadd.f32 %v136, %v142
    %v145 = vsub.f32 1.0, %v143
    %v146 = vsub.f32 1.0, %v144
    %v147 = vmul.f32 %v145, %v145
    %v148 = vmul.f32 %v146, %v146
    %v149 = vmul.f32 %v147, %v97
    %v150 = vmul.f32 %v148, %v98
    %v151 = vld [vmem:[#allocation7] sm:$0xff]
    %v152 = vadd.f32 %v149, %v150
    %v153 = vadd.f32 %v151, %v152
    %154 = vst [vmem:[#allocation7] sm:$0xff] %v153
    // Predicated region
    $region22: #{tpu_custom_call.1} parent=1 // pred_check
      _
    $region23: #{tpu_custom_call.1} parent=1 // pred_check_branch
      %156 = sbr.rel (0) target = $region25
    $region24: #{tpu_custom_call.1} parent=1 // pred_region
      %158 = vsyncadd [#allocation4], 0
      %s160 = sshll.u32 [#allocation7], 4
      %s161 = int_to_ptr.vmem [resolvable:$true] %s160
      %s162 = sshll.u32 %s2, 4
      %s163 = int_to_ptr.hbm [resolvable:$true] %s162
      %165 = dma.vmem_to_hbm [thread:$0]  %s161, 128, %s163, [#allocation4]
    $region25: #{tpu_custom_call.1} parent=1 // pred_fallthru
      _
    // Predicated region
    $region26: #{tpu_custom_call.1} parent=1 // pred_check
      _
    $region27: #{tpu_custom_call.1} parent=1 // pred_check_branch
      %167 = sbr.rel (0) target = $region29
    $region28: #{tpu_custom_call.1} parent=1 // pred_region
      %169 = dma.done [#allocation4], 128
    $region29: #{tpu_custom_call.1} parent=1 // pred_fallthru
      _
    %170 = vsyncpa [#allocation3], 1
    %171 = vsyncpa [#allocation6], 1
    %172 = vsyncpa [#allocation4], 1

</llo_original>
